<compile_context>
chip_gen: v7x
topology: tpu7x:2x2x1
jax: 0.10.0
libtpu: 0.0.40
codegen_flags: <defaults>
</compile_context>

<pallas_src>
import functools

import jax
import jax.numpy as jnp
from jax.experimental import pallas as pl
from jax.experimental.pallas import tpu as pltpu

P = 128  # lane-padded hidden / output width


# ---------------------------------------------------------------------------
# Kernel
# ---------------------------------------------------------------------------
def _actor_kernel(x_ref, w_ref, b_ref, out_ref, *, state_dim, action_dim):
    """Fused 4-layer actor head.

    x_ref   : (TILE_B, state_dim)  activation tile
    w_ref   : (4, P, P)            packed, zero-padded weights (VMEM resident)
    b_ref   : (4, 1, P)            packed, zero-padded biases  (VMEM resident)
    out_ref : (TILE_B, P)          lane-dense softmax probabilities
                                   (lanes >= action_dim are exactly 0)
    """
    x = x_ref[...]
    tile_b = x.shape[0]
    mxu_dtype = w_ref.dtype

    # ---- fci + relu: K == state_dim (tiny) -> VPU broadcast FMAs, no MXU ----
    w0 = w_ref[0].astype(jnp.float32)                 # (P, P)
    acc = x[:, 0:1] * w0[0:1, :] + b_ref[0]           # (TILE_B, P)
    for k in range(1, state_dim):                     # statically unrolled
        acc = acc + x[:, k:k + 1] * w0[k:k + 1, :]
    h = jnp.maximum(acc, 0.0)

    # ---- fc1 + relu (MXU, f32 accumulate) ------------------------------------
    h = jnp.dot(h.astype(mxu_dtype), w_ref[1],
                preferred_element_type=jnp.float32) + b_ref[1]
    h = jnp.maximum(h, 0.0)

    # ---- fc2 + leaky_relu (PyTorch default negative_slope = 0.01) ------------
    z = jnp.dot(h.astype(mxu_dtype), w_ref[2],
                preferred_element_type=jnp.float32) + b_ref[2]
    h = jnp.maximum(z, 0.01 * z)

    # ---- fcf + softmax (masked full-width, divide-free normalize) ------------
    logits = jnp.dot(h.astype(mxu_dtype), w_ref[3],
                     preferred_element_type=jnp.float32) + b_ref[3]
    lane = jax.lax.broadcasted_iota(jnp.int32, (tile_b, P), 1)
    logits = jnp.where(lane < action_dim, logits, -1e30)   # mask padded lanes
    m = jnp.max(logits, axis=-1, keepdims=True)
    e = jnp.exp(logits - m)                                 # padded lanes -> 0
    denom = jnp.sum(e, axis=-1, keepdims=True)
    r = pl.reciprocal(denom, approx=True)                   # EUP vrcp
    r = r * (2.0 - denom * r)                               # one Newton step
    out_ref[...] = e * r                                    # lane-dense store


# ---------------------------------------------------------------------------
# Host-side wrapper
# ---------------------------------------------------------------------------
def _round_up(x, m):
    return ((x + m - 1) // m) * m


def _cdiv(a, b):
    return -(-a // b)


def pack_params(params, mxu_dtype=jnp.float32):
    """Pack the 4 (w, b) pairs into zero-padded (4,P,P) / (4,1,P) slabs."""
    max_dim = max(max(w.shape[0], w.shape[1]) for w, _ in params)
    pad = max(P, _round_up(max_dim, P))
    w_slab = jnp.zeros((4, pad, pad), jnp.float32)
    b_slab = jnp.zeros((4, 1, pad), jnp.float32)
    for i, (w, b) in enumerate(params):
        w_slab = w_slab.at[i, : w.shape[0], : w.shape[1]].set(w)
        b_slab = b_slab.at[i, :, : b.shape[1]].set(b)
    return w_slab.astype(mxu_dtype), b_slab, pad


def actor_forward(state, params, tile_b_max=2048, mxu_dtype=jnp.float32):
    (w0, _), _, _, (w3, _) = params
    state_dim = w0.shape[0]
    hidden_dim = w0.shape[1]
    action_dim = w3.shape[1]

    tile_b_max = max(8, _round_up(tile_b_max, 8))
    w_slab, b_slab, pad = pack_params(params, mxu_dtype)

    # --- batch tiling: multiple of 8, minimal padding, >=2 tiles for big B ---
    B = state.shape[0]
    b_pad8 = _round_up(B, 8)
    num_tiles = _cdiv(b_pad8, tile_b_max)
    if num_tiles == 1 and b_pad8 >= 1024:
        num_tiles = 2               # let v7x's two TensorCores split the batch
    tile_b = _round_up(_cdiv(b_pad8, num_tiles), 8)
    b_pad = tile_b * num_tiles
    if b_pad != B:
        state = jnp.pad(state, ((0, b_pad - B), (0, 0)))
    grid = (num_tiles,)

    kernel = functools.partial(
        _actor_kernel, state_dim=state_dim, action_dim=action_dim)

    flops = 2 * b_pad * (state_dim * pad + 3 * pad * pad)
    bytes_accessed = (4 * b_pad * state_dim
                      + int(w_slab.size) * w_slab.dtype.itemsize
                      + int(b_slab.size) * 4
                      + 4 * b_pad * pad)

    out = pl.pallas_call(
        kernel,
        out_shape=jax.ShapeDtypeStruct((b_pad, pad), jnp.float32),
        grid=grid,
        in_specs=[
            pl.BlockSpec((tile_b, state_dim), lambda i: (i, 0)),
            # Weight/bias slabs map to the same block every grid step ->
            # fetched once, VMEM-resident across batch tiles.
            pl.BlockSpec((4, pad, pad), lambda i: (0, 0, 0)),
            pl.BlockSpec((4, 1, pad), lambda i: (0, 0, 0)),
        ],
        out_specs=pl.BlockSpec((tile_b, pad), lambda i: (i, 0)),
        compiler_params=pltpu.CompilerParams(
            dimension_semantics=("parallel",)),
        cost_estimate=pl.CostEstimate(
            flops=flops,
            transcendentals=b_pad * (pad + 1),
            bytes_accessed=bytes_accessed),
    )(state, w_slab, b_slab)

    # Host-side slice: drop padded batch rows and padded action lanes.
    return out[:B, :action_dim]


# ---------------------------------------------------------------------------
# Reference / init
# ---------------------------------------------------------------------------
def init_linear(key, in_dim, out_dim):
    # deterministic, PyTorch-like uniform(-1/sqrt(in), 1/sqrt(in)) init
    kw, kb = jax.random.split(key)
    bound = 1.0 / jnp.sqrt(jnp.float32(in_dim))
    w = jax.random.uniform(kw, (in_dim, out_dim), jnp.float32, -bound, bound)
    b = jax.random.uniform(kb, (1, out_dim), jnp.float32, -bound, bound)
    return w, b


def reference_forward(state, params):
    (w0, b0), (w1, b1), (w2, b2), (w3, b3) = params
    h = jnp.maximum(state @ w0 + b0, 0.0)
    h = jnp.maximum(h @ w1 + b1, 0.0)
    z = h @ w2 + b2
    h = jnp.where(z >= 0.0, z, 0.01 * z)
    logits = h @ w3 + b3
    return jax.nn.softmax(logits, axis=-1)


if __name__ == "__main__":
    # King-moves windy gridworld: state = (row, col), 8 king-move actions.
    state_dim, action_dim, hidden_dim = 2, 8, 32
    batch = 8

    key = jax.random.PRNGKey(0)
    k_state, k0, k1, k2, k3 = jax.random.split(key, 5)

    state = jax.random.uniform(k_state, (batch, state_dim), jnp.float32)
    params = (
        init_linear(k0, state_dim, hidden_dim),
        init_linear(k1, hidden_dim, hidden_dim),
        init_linear(k2, hidden_dim, hidden_dim),
        init_linear(k3, hidden_dim, action_dim),
    )

    # TODO(synk): pass mxu_dtype=jnp.bfloat16 on v6e/v7x for MXU throughput;
    # kept f32 here to hold the 1e-4 comparison tolerance.
    out = actor_forward(state, params)
    out = jax.block_until_ready(out)

    ref = reference_forward(state, params)
    assert out.shape == (batch, action_dim)
    # Slightly relaxed tolerance to cover the approximate-reciprocal softmax
    # normalize (one Newton refinement keeps it well inside 1e-4).
    assert jnp.allclose(out, ref, atol=1e-4, rtol=1e-4)
    assert jnp.allclose(jnp.sum(out, axis=-1), 1.0, atol=1e-4)

    print("KERNEL_OK")
</pallas_src>

<mosaic_0001>
module attributes {stable_mosaic.version = 11 : i64} {
  func.func @_actor_kernel(%arg0: i32, %arg1: memref<8x2xf32, #tpu.memory_space<vmem>>, %arg2: memref<4x128x128xf32, #tpu.memory_space<vmem>>, %arg3: memref<4x1x128xf32, #tpu.memory_space<vmem>>, %arg4: memref<8x128xf32, #tpu.memory_space<vmem>>) attributes {dimension_semantics = [#tpu.dimension_semantics<parallel>], iteration_bounds = array<i64: 1>, scalar_prefetch = 0 : i64, scratch_operands = 0 : i64, tpu.core_type = #tpu.core_type<tc>, window_params = [{transform_indices = @transform_0, window_bounds = array<i64: 8, 2>}, {pipeline_mode = #tpu.pipeline_mode<synchronous>, transform_indices = @transform_1, window_bounds = array<i64: 4, 128, 128>}, {pipeline_mode = #tpu.pipeline_mode<synchronous>, transform_indices = @transform_2, window_bounds = array<i64: 4, 1, 128>}, {transform_indices = @transform_3, window_bounds = array<i64: 8, 128>}]} {
    %c0 = arith.constant 0 : index
    %c0_0 = arith.constant 0 : index
    %0 = vector.load %arg1[%c0, %c0_0] : memref<8x2xf32, #tpu.memory_space<vmem>>, vector<8x2xf32>
    %c0_1 = arith.constant 0 : index
    %c0_2 = arith.constant 0 : index
    %c0_3 = arith.constant 0 : index
    %1 = vector.load %arg2[%c0_1, %c0_2, %c0_3] : memref<4x128x128xf32, #tpu.memory_space<vmem>>, vector<1x128x128xf32>
    %2 = vector.shape_cast %1 : vector<1x128x128xf32> to vector<128x128xf32>
    %3 = vector.extract_strided_slice %0 {offsets = [0, 0], sizes = [8, 1], strides = [1, 1]} : vector<8x2xf32> to vector<8x1xf32>
    %4 = vector.extract_strided_slice %2 {offsets = [0, 0], sizes = [1, 128], strides = [1, 1]} : vector<128x128xf32> to vector<1x128xf32>
    %5 = vector.broadcast %3 : vector<8x1xf32> to vector<8x128xf32>
    %6 = vector.broadcast %4 : vector<1x128xf32> to vector<8x128xf32>
    %7 = arith.mulf %5, %6 : vector<8x128xf32>
    %c0_4 = arith.constant 0 : index
    %c0_5 = arith.constant 0 : index
    %c0_6 = arith.constant 0 : index
    %8 = vector.load %arg3[%c0_4, %c0_5, %c0_6] : memref<4x1x128xf32, #tpu.memory_space<vmem>>, vector<1x1x128xf32>
    %9 = vector.shape_cast %8 : vector<1x1x128xf32> to vector<1x128xf32>
    %10 = vector.broadcast %9 : vector<1x128xf32> to vector<8x128xf32>
    %11 = arith.addf %7, %10 : vector<8x128xf32>
    %12 = vector.extract_strided_slice %0 {offsets = [0, 1], sizes = [8, 1], strides = [1, 1]} : vector<8x2xf32> to vector<8x1xf32>
    %13 = vector.extract_strided_slice %2 {offsets = [1, 0], sizes = [1, 128], strides = [1, 1]} : vector<128x128xf32> to vector<1x128xf32>
    %14 = vector.broadcast %12 : vector<8x1xf32> to vector<8x128xf32>
    %15 = vector.broadcast %13 : vector<1x128xf32> to vector<8x128xf32>
    %16 = arith.mulf %14, %15 : vector<8x128xf32>
    %17 = arith.addf %11, %16 : vector<8x128xf32>
    %cst = arith.constant 0.000000e+00 : f32
    %18 = vector.broadcast %cst : f32 to vector<8x128xf32>
    %19 = arith.maximumf %17, %18 : vector<8x128xf32>
    %c1 = arith.constant 1 : index
    %c0_7 = arith.constant 0 : index
    %c0_8 = arith.constant 0 : index
    %20 = vector.load %arg2[%c1, %c0_7, %c0_8] : memref<4x128x128xf32, #tpu.memory_space<vmem>>, vector<1x128x128xf32>
    %21 = vector.shape_cast %20 : vector<1x128x128xf32> to vector<128x128xf32>
    %cst_9 = arith.constant dense<0.000000e+00> : vector<8x128xf32>
    %22 = tpu.matmul %19, %21, %cst_9 {dimension_numbers = #tpu.dot_dimension_numbers<[1], [0], [0], [1], [0, 0, 1, 1], [], []>} : vector<8x128xf32>, vector<128x128xf32>, vector<8x128xf32> -> vector<8x128xf32>
    %c1_10 = arith.constant 1 : index
    %c0_11 = arith.constant 0 : index
    %c0_12 = arith.constant 0 : index
    %23 = vector.load %arg3[%c1_10, %c0_11, %c0_12] : memref<4x1x128xf32, #tpu.memory_space<vmem>>, vector<1x1x128xf32>
    %24 = vector.shape_cast %23 : vector<1x1x128xf32> to vector<1x128xf32>
    %25 = vector.broadcast %24 : vector<1x128xf32> to vector<8x128xf32>
    %26 = arith.addf %22, %25 : vector<8x128xf32>
    %cst_13 = arith.constant 0.000000e+00 : f32
    %27 = vector.broadcast %cst_13 : f32 to vector<8x128xf32>
    %28 = arith.maximumf %26, %27 : vector<8x128xf32>
    %c2 = arith.constant 2 : index
    %c0_14 = arith.constant 0 : index
    %c0_15 = arith.constant 0 : index
    %29 = vector.load %arg2[%c2, %c0_14, %c0_15] : memref<4x128x128xf32, #tpu.memory_space<vmem>>, vector<1x128x128xf32>
    %30 = vector.shape_cast %29 : vector<1x128x128xf32> to vector<128x128xf32>
    %cst_16 = arith.constant dense<0.000000e+00> : vector<8x128xf32>
    %31 = tpu.matmul %28, %30, %cst_16 {dimension_numbers = #tpu.dot_dimension_numbers<[1], [0], [0], [1], [0, 0, 1, 1], [], []>} : vector<8x128xf32>, vector<128x128xf32>, vector<8x128xf32> -> vector<8x128xf32>
    %c2_17 = arith.constant 2 : index
    %c0_18 = arith.constant 0 : index
    %c0_19 = arith.constant 0 : index
    %32 = vector.load %arg3[%c2_17, %c0_18, %c0_19] : memref<4x1x128xf32, #tpu.memory_space<vmem>>, vector<1x1x128xf32>
    %33 = vector.shape_cast %32 : vector<1x1x128xf32> to vector<1x128xf32>
    %34 = vector.broadcast %33 : vector<1x128xf32> to vector<8x128xf32>
    %35 = arith.addf %31, %34 : vector<8x128xf32>
    %cst_20 = arith.constant 0.00999999977 : f32
    %36 = vector.broadcast %cst_20 : f32 to vector<8x128xf32>
    %37 = arith.mulf %36, %35 : vector<8x128xf32>
    %38 = arith.maximumf %35, %37 : vector<8x128xf32>
    %c3 = arith.constant 3 : index
    %c0_21 = arith.constant 0 : index
    %c0_22 = arith.constant 0 : index
    %39 = vector.load %arg2[%c3, %c0_21, %c0_22] : memref<4x128x128xf32, #tpu.memory_space<vmem>>, vector<1x128x128xf32>
    %40 = vector.shape_cast %39 : vector<1x128x128xf32> to vector<128x128xf32>
    %cst_23 = arith.constant dense<0.000000e+00> : vector<8x128xf32>
    %41 = tpu.matmul %38, %40, %cst_23 {dimension_numbers = #tpu.dot_dimension_numbers<[1], [0], [0], [1], [0, 0, 1, 1], [], []>} : vector<8x128xf32>, vector<128x128xf32>, vector<8x128xf32> -> vector<8x128xf32>
    %c3_24 = arith.constant 3 : index
    %c0_25 = arith.constant 0 : index
    %c0_26 = arith.constant 0 : index
    %42 = vector.load %arg3[%c3_24, %c0_25, %c0_26] : memref<4x1x128xf32, #tpu.memory_space<vmem>>, vector<1x1x128xf32>
    %43 = vector.shape_cast %42 : vector<1x1x128xf32> to vector<1x128xf32>
    %44 = vector.broadcast %43 : vector<1x128xf32> to vector<8x128xf32>
    %45 = arith.addf %41, %44 : vector<8x128xf32>
    %46 = tpu.iota {dimensions = array<i32: 1>} : vector<8x128xi32>
    %c8_i32 = arith.constant 8 : i32
    %47 = vector.broadcast %c8_i32 : i32 to vector<8x128xi32>
    %48 = arith.cmpi slt, %46, %47 : vector<8x128xi32>
    %cst_27 = arith.constant -1.000000e+30 : f32
    %49 = vector.broadcast %cst_27 : f32 to vector<8x128xf32>
    %50 = arith.select %48, %45, %49 : vector<8x128xi1>, vector<8x128xf32>
    %cst_28 = arith.constant dense<0xFF800000> : vector<8xf32>
    %51 = vector.multi_reduction <maximumf>, %50, %cst_28 [1] : vector<8x128xf32> to vector<8xf32>
    %52 = vector.shape_cast %51 : vector<8xf32> to vector<8x1xf32>
    %53 = vector.broadcast %52 : vector<8x1xf32> to vector<8x128xf32>
    %54 = arith.subf %50, %53 : vector<8x128xf32>
    %55 = math.exp %54 : vector<8x128xf32>
    %cst_29 = arith.constant dense<0.000000e+00> : vector<8xf32>
    %56 = vector.multi_reduction <add>, %55, %cst_29 [1] : vector<8x128xf32> to vector<8xf32>
    %57 = vector.shape_cast %56 : vector<8xf32> to vector<8x1xf32>
    %58 = tpu.reciprocal %57 {approx = true} : vector<8x1xf32> -> vector<8x1xf32>
    %59 = arith.mulf %57, %58 : vector<8x1xf32>
    %cst_30 = arith.constant 2.000000e+00 : f32
    %60 = vector.broadcast %cst_30 : f32 to vector<8x1xf32>
    %61 = arith.subf %60, %59 : vector<8x1xf32>
    %62 = arith.mulf %58, %61 : vector<8x1xf32>
    %63 = vector.broadcast %62 : vector<8x1xf32> to vector<8x128xf32>
    %64 = arith.mulf %55, %63 : vector<8x128xf32>
    %c0_31 = arith.constant 0 : index
    %c0_32 = arith.constant 0 : index
    %65 = vector.load %arg4[%c0_31, %c0_32] : memref<8x128xf32, #tpu.memory_space<vmem>>, vector<8x128xf32>
    tpu.vector_store %arg4[%c0_31, %c0_32], %64 {strides = array<i32>} : memref<8x128xf32, #tpu.memory_space<vmem>>, vector<8x128xf32>,
    return
  }
  func.func @transform_0(%arg0: i32) -> (i32, i32) {
    %c0_i32 = arith.constant 0 : i32
    %c0_i32_0 = arith.constant 0 : i32
    return %arg0, %c0_i32 : i32, i32
  }
  func.func @transform_1(%arg0: i32) -> (i32, i32, i32) {
    %c0_i32 = arith.constant 0 : i32
    %c0_i32_0 = arith.constant 0 : i32
    %c0_i32_1 = arith.constant 0 : i32
    %c0_i32_2 = arith.constant 0 : i32
    return %c0_i32, %c0_i32_0, %c0_i32_1 : i32, i32, i32
  }
  func.func @transform_2(%arg0: i32) -> (i32, i32, i32) {
    %c0_i32 = arith.constant 0 : i32
    %c0_i32_0 = arith.constant 0 : i32
    %c0_i32_1 = arith.constant 0 : i32
    %c0_i32_2 = arith.constant 0 : i32
    return %c0_i32, %c0_i32_0, %c0_i32_1 : i32, i32, i32
  }
  func.func @transform_3(%arg0: i32) -> (i32, i32) {
    %c0_i32 = arith.constant 0 : i32
    %c0_i32_0 = arith.constant 0 : i32
    return %arg0, %c0_i32 : i32, i32
  }
}

</mosaic_0001>

<llo_original>
// kernel: tpu_custom_call.1
$region0: #{tpu_custom_call.1}
  #allocation0 [shape = 'u32[]', space=smem, size = 0x4, offset = 0x4, fixed_abs, tag = 'smem constant byte address 0x4 - core index']
  #allocation1 [shape = 'u32[144,128]{1,0:T(1,128)}', space=vmem, size = 0x12000, scoped, tag = 'internal scratch']
  %s0 = inlined_call_operand.vmem [shape: f32[8,2], index: 0, kind: input, shape index: {}]
  %s1 = inlined_call_operand.hbm [shape: f32[4,128,128], index: 1, kind: input, shape index: {}]
  %s2 = inlined_call_operand.vmem [shape: f32[4,1,128], index: 2, kind: input, shape index: {}]
  %s3 = inlined_call_operand.hbm [shape: f32[8,128], index: 3, kind: output, shape index: {}]
  %s4 = sld [smem:[#allocation0]]
  $region26: #{tpu_custom_call.1} parent=0
    _
  %s6 = ssub.s32 1, %s4
  %s7 = scalar_select 0, %s6, %s4
  $region1: #{tpu_custom_call.1} parent=0
    #allocation2 [shape = 'u8[262144]{0}', space=vmem, size = 0x40000, scoped, tag = 'input window, operand 1, single buffered']
    #allocation3 [shape = 's32[1]{0}', space=sflag, size = 0x4, scoped, tag = 'scoped memory for tpu_custom_call.1']
    #allocation4 [shape = 's32[1]{0}', space=sflag, size = 0x4, scoped, tag = 'scoped memory for tpu_custom_call.1']
    #allocation5 [shape = 'u8[4096]{0}', space=vmem, size = 0x1000, scoped, tag = 'output window, operand 0, single buffered']
    %8 = vsyncpa [#allocation3], 0
    %9 = vsyncpa [#allocation4], 0
    // Predicated region
    $region2: #{tpu_custom_call.1} parent=1 // pred_check
      _
    $region3: #{tpu_custom_call.1} parent=1 // pred_check_branch
      %11 = sbr.rel (0) target = $region5
    $region4: #{tpu_custom_call.1} parent=1 // pred_region
      _
    $region5: #{tpu_custom_call.1} parent=1 // pred_fallthru
      _
    // Predicated region
    $region6: #{tpu_custom_call.1} parent=1 // pred_check
      _
    $region7: #{tpu_custom_call.1} parent=1 // pred_check_branch
      %13 = sbr.rel (0) target = $region9
    $region8: #{tpu_custom_call.1} parent=1 // pred_region
      %s15 = ssub.s32 8192, 8192
      %16 = vsyncadd [#allocation3], %s15
      %s17 = sshll.u32 [#allocation2], 4
      %s18 = int_to_ptr.vmem [resolvable:$true] %s17
      %23 = dma.hbm_to_vmem [thread:$0]  %s1, 8192, %s18, [#allocation3], 128, 128, 8
    $region9: #{tpu_custom_call.1} parent=1 // pred_fallthru
      _
    // Predicated region
    $region10: #{tpu_custom_call.1} parent=1 // pred_check
      _
    $region11: #{tpu_custom_call.1} parent=1 // pred_check_branch
      %25 = sbr.rel (0) target = $region13
    $region12: #{tpu_custom_call.1} parent=1 // pred_region
      _
    $region13: #{tpu_custom_call.1} parent=1 // pred_fallthru
      _
    // Predicated region
    $region14: #{tpu_custom_call.1} parent=1 // pred_check
      _
    $region15: #{tpu_custom_call.1} parent=1 // pred_check_branch
      %27 = sbr.rel (0) target = $region17
    $region16: #{tpu_custom_call.1} parent=1 // pred_region
      %28 = dma.done [#allocation3], 8192
    $region17: #{tpu_custom_call.1} parent=1 // pred_fallthru
      _
    %v29 = vld [vmem:[%s0] sm:$0xff]
    %v30 = vld [vmem:[#allocation2] sm:$0xff]
    %32 = vset.pattern.permute.xlu0 0
    %33 = vperm.xlu0 %32, %v29
    %v34 = vpop.permute.xlu0 %33
    %v36 = vlaneseq
    %v37 = vshrl.u32 %v36, 7
    %v38 = vsub.s32 0, %v37
    %v39 = vrot.slane %v30, %v38
    %v40 = vmul.f32 %v34, %v39
    %v41 = vld [vmem:[%s2] sm:$0x1]
    %v43 = vlaneseq
    %v44 = vshrl.u32 %v43, 7
    %v45 = vsub.s32 0, %v44
    %v46 = vrot.slane %v41, %v45
    %v48 = vadd.f32 %v40, %v46
    %49 = vset.pattern.permute.xlu0 1
    %50 = vperm.xlu0 %49, %v29
    %v51 = vpop.permute.xlu0 %50
    %v53 = vlaneseq
    %v54 = vshrl.u32 %v53, 7
    %v55 = vsub.s32 1, %v54
    %v56 = vrot.slane %v30, %v55
    %v57 = vmul.f32 %v51, %v56
    %v58 = vadd.f32 %v48, %v57
    %v59 = vmax.f32 %v58, 0.0
    %s60 = scalar_lea.vmem [#allocation2], 128
    %v61 = vld [vmem:[%s60] sm:$0xff]
    %v62 = vld [vmem:[%s60 + $0x8] sm:$0xff]
    %v63 = vld [vmem:[%s60 + $0x10] sm:$0xff]
    %v64 = vld [vmem:[%s60 + $0x18] sm:$0xff]
    %v65 = vld [vmem:[%s60 + $0x20] sm:$0xff]
    %v66 = vld [vmem:[%s60 + $0x28] sm:$0xff]
    %v67 = vld [vmem:[%s60 + $0x30] sm:$0xff]
    %v68 = vld [vmem:[%s60 + $0x38] sm:$0xff]
    %v69 = vld [vmem:[%s60 + $0x40] sm:$0xff]
    %v70 = vld [vmem:[%s60 + $0x48] sm:$0xff]
    %v71 = vld [vmem:[%s60 + $0x50] sm:$0xff]
    %v72 = vld [vmem:[%s60 + $0x58] sm:$0xff]
    %v73 = vld [vmem:[%s60 + $0x60] sm:$0xff]
    %v74 = vld [vmem:[%s60 + $0x68] sm:$0xff]
    %v75 = vld [vmem:[%s60 + $0x70] sm:$0xff]
    %v76 = vld [vmem:[%s60 + $0x78] sm:$0xff]
    %s77 = scalar_lea.vmem %s2, 1
    %v78 = vld [vmem:[%s77] sm:$0x1]
    %v80 = vlaneseq
    %v81 = vshrl.u32 %v80, 7
    %v82 = vsub.s32 0, %v81
    %v83 = vrot.slane %v78, %v82
    %85 = vmatprep.subr.mxu0 0.0
    %86 = vmatpush1.msra.mxu0 %v61
    %87 = vmatprep.subr.mxu0 0.0
    %88 = vmatpush1.msra.mxu0 %v62
    %89 = vmatprep.subr.mxu0 0.0
    %90 = vmatpush1.msra.mxu0 %v63
    %91 = vmatprep.subr.mxu0 0.0
    %92 = vmatpush1.msra.mxu0 %v64
    %93 = vmatprep.subr.mxu0 0.0
    %94 = vmatpush1.msra.mxu0 %v65
    %95 = vmatprep.subr.mxu0 0.0
    %96 = vmatpush1.msra.mxu0 %v66
    %97 = vmatprep.subr.mxu0 0.0
    %98 = vmatpush1.msra.mxu0 %v67
    %99 = vmatprep.subr.mxu0 0.0
    %100 = vmatpush1.msra.mxu0 %v68
    %101 = vmatprep.subr.mxu0 0.0
    %102 = vmatpush1.msra.mxu0 %v69
    %103 = vmatprep.subr.mxu0 0.0
    %104 = vmatpush1.msra.mxu0 %v70
    %105 = vmatprep.subr.mxu0 0.0
    %106 = vmatpush1.msra.mxu0 %v71
    %107 = vmatprep.subr.mxu0 0.0
    %108 = vmatpush1.msra.mxu0 %v72
    %109 = vmatprep.subr.mxu0 0.0
    %110 = vmatpush1.msra.mxu0 %v73
    %111 = vmatprep.subr.mxu0 0.0
    %112 = vmatpush1.msra.mxu0 %v74
    %113 = vmatprep.subr.mxu0 0.0
    %114 = vmatpush1.msra.mxu0 %v75
    %115 = vmatprep.subr.mxu0 0.0
    %116 = vmatpush1.msra.mxu0 %v76
    %117 = vmatprep.subr.mxu0 0.0
    %118 = vmatpush1.msra.mxu0 0.0
    %119 = vmatprep.subr.mxu0 0.0
    %120 = vmatpush1.msra.mxu0 0.0
    %121 = vmatprep.subr.mxu0 0.0
    %122 = vmatpush1.msra.mxu0 0.0
    %123 = vmatprep.subr.mxu0 0.0
    %124 = vmatpush1.msra.mxu0 0.0
    %125 = vmatprep.subr.mxu0 0.0
    %126 = vmatpush1.msra.mxu0 0.0
    %127 = vmatprep.subr.mxu0 0.0
    %128 = vmatpush1.msra.mxu0 0.0
    %129 = vmatprep.subr.mxu0 0.0
    %130 = vmatpush1.msra.mxu0 0.0
    %131 = vmatprep.subr.mxu0 0.0
    %132 = vmatpush1.msra.mxu0 0.0
    %133 = vmatprep.subr.mxu0 0.0
    %134 = vmatpush1.msra.mxu0 0.0
    %135 = vmatprep.subr.mxu0 0.0
    %136 = vmatpush1.msra.mxu0 0.0
    %137 = vmatprep.subr.mxu0 0.0
    %138 = vmatpush1.msra.mxu0 0.0
    %139 = vmatprep.subr.mxu0 0.0
    %140 = vmatpush1.msra.mxu0 0.0
    %141 = vmatprep.subr.mxu0 0.0
    %142 = vmatpush1.msra.mxu0 0.0
    %143 = vmatprep.subr.mxu0 0.0
    %144 = vmatpush1.msra.mxu0 0.0
    %145 = vmatprep.subr.mxu0 0.0
    %146 = vmatpush1.msra.mxu0 0.0
    %147 = vmatprep.subr.mxu0 0.0
    %148 = vmatpush1.msra.mxu0 0.0
    %149 = vmatprep.mubr.f32.mxu0 0.0
    %150 = vmatmul.mubr.f32.gmra.mrb[0].mxu0 %v59
    %v151 = vpop.f32.mrb[0].mxu0
    %v152 = vadd.f32 %v83, %v151
    %v153 = vpop.f32.mrb[0].mxu0
    %154 = vdwg.mxu0
    %v155 = vmax.f32 %v152, 0.0
    %s156 = scalar_lea.vmem [#allocation2], 256
    %v157 = vld [vmem:[%s156] sm:$0xff]
    %v158 = vld [vmem:[%s156 + $0x8] sm:$0xff]
    %v159 = vld [vmem:[%s156 + $0x10] sm:$0xff]
    %v160 = vld [vmem:[%s156 + $0x18] sm:$0xff]
    %v161 = vld [vmem:[%s156 + $0x20] sm:$0xff]
    %v162 = vld [vmem:[%s156 + $0x28] sm:$0xff]
    %v163 = vld [vmem:[%s156 + $0x30] sm:$0xff]
    %v164 = vld [vmem:[%s156 + $0x38] sm:$0xff]
    %v165 = vld [vmem:[%s156 + $0x40] sm:$0xff]
    %v166 = vld [vmem:[%s156 + $0x48] sm:$0xff]
    %v167 = vld [vmem:[%s156 + $0x50] sm:$0xff]
    %v168 = vld [vmem:[%s156 + $0x58] sm:$0xff]
    %v169 = vld [vmem:[%s156 + $0x60] sm:$0xff]
    %v170 = vld [vmem:[%s156 + $0x68] sm:$0xff]
    %v171 = vld [vmem:[%s156 + $0x70] sm:$0xff]
    %v172 = vld [vmem:[%s156 + $0x78] sm:$0xff]
    %s173 = scalar_lea.vmem %s2, 2
    %v174 = vld [vmem:[%s173] sm:$0x1]
    %v176 = vlaneseq
    %v177 = vshrl.u32 %v176, 7
    %v178 = vsub.s32 0, %v177
    %v179 = vrot.slane %v174, %v178
    %181 = vmatprep.subr.mxu0 0.0
    %182 = vmatpush1.msra.mxu0 %v157
    %183 = vmatprep.subr.mxu0 0.0
    %184 = vmatpush1.msra.mxu0 %v158
    %185 = vmatprep.subr.mxu0 0.0
    %186 = vmatpush1.msra.mxu0 %v159
    %187 = vmatprep.subr.mxu0 0.0
    %188 = vmatpush1.msra.mxu0 %v160
    %189 = vmatprep.subr.mxu0 0.0
    %190 = vmatpush1.msra.mxu0 %v161
    %191 = vmatprep.subr.mxu0 0.0
    %192 = vmatpush1.msra.mxu0 %v162
    %193 = vmatprep.subr.mxu0 0.0
    %194 = vmatpush1.msra.mxu0 %v163
    %195 = vmatprep.subr.mxu0 0.0
    %196 = vmatpush1.msra.mxu0 %v164
    %197 = vmatprep.subr.mxu0 0.0
    %198 = vmatpush1.msra.mxu0 %v165
    %199 = vmatprep.subr.mxu0 0.0
    %200 = vmatpush1.msra.mxu0 %v166
    %201 = vmatprep.subr.mxu0 0.0
    %202 = vmatpush1.msra.mxu0 %v167
    %203 = vmatprep.subr.mxu0 0.0
    %204 = vmatpush1.msra.mxu0 %v168
    %205 = vmatprep.subr.mxu0 0.0
    %206 = vmatpush1.msra.mxu0 %v169
    %207 = vmatprep.subr.mxu0 0.0
    %208 = vmatpush1.msra.mxu0 %v170
    %209 = vmatprep.subr.mxu0 0.0
    %210 = vmatpush1.msra.mxu0 %v171
    %211 = vmatprep.subr.mxu0 0.0
    %212 = vmatpush1.msra.mxu0 %v172
    %213 = vmatprep.subr.mxu0 0.0
    %214 = vmatpush1.msra.mxu0 0.0
    %215 = vmatprep.subr.mxu0 0.0
    %216 = vmatpush1.msra.mxu0 0.0
    %217 = vmatprep.subr.mxu0 0.0
    %218 = vmatpush1.msra.mxu0 0.0
    %219 = vmatprep.subr.mxu0 0.0
    %220 = vmatpush1.msra.mxu0 0.0
    %221 = vmatprep.subr.mxu0 0.0
    %222 = vmatpush1.msra.mxu0 0.0
    %223 = vmatprep.subr.mxu0 0.0
    %224 = vmatpush1.msra.mxu0 0.0
    %225 = vmatprep.subr.mxu0 0.0
    %226 = vmatpush1.msra.mxu0 0.0
    %227 = vmatprep.subr.mxu0 0.0
    %228 = vmatpush1.msra.mxu0 0.0
    %229 = vmatprep.subr.mxu0 0.0
    %230 = vmatpush1.msra.mxu0 0.0
    %231 = vmatprep.subr.mxu0 0.0
    %232 = vmatpush1.msra.mxu0 0.0
    %233 = vmatprep.subr.mxu0 0.0
    %234 = vmatpush1.msra.mxu0 0.0
    %235 = vmatprep.subr.mxu0 0.0
    %236 = vmatpush1.msra.mxu0 0.0
    %237 = vmatprep.subr.mxu0 0.0
    %238 = vmatpush1.msra.mxu0 0.0
    %239 = vmatprep.subr.mxu0 0.0
    %240 = vmatpush1.msra.mxu0 0.0
    %241 = vmatprep.subr.mxu0 0.0
    %242 = vmatpush1.msra.mxu0 0.0
    %243 = vmatprep.subr.mxu0 0.0
    %244 = vmatpush1.msra.mxu0 0.0
    %245 = vmatprep.mubr.f32.mxu0 0.0
    %246 = vmatmul.mubr.f32.gmra.mrb[0].mxu0 %v155
    %v247 = vpop.f32.mrb[0].mxu0
    %v248 = vadd.f32 %v179, %v247
    %v249 = vpop.f32.mrb[0].mxu0
    %250 = vdwg.mxu0
    %v251 = vmul.f32 %v248, 0.01
    %v252 = vmax.f32 %v248, %v251
    %s253 = scalar_lea.vmem [#allocation2], 384
    %v254 = vld [vmem:[%s253] sm:$0xff]
    %v255 = vld [vmem:[%s253 + $0x8] sm:$0xff]
    %v256 = vld [vmem:[%s253 + $0x10] sm:$0xff]
    %v257 = vld [vmem:[%s253 + $0x18] sm:$0xff]
    %v258 = vld [vmem:[%s253 + $0x20] sm:$0xff]
    %v259 = vld [vmem:[%s253 + $0x28] sm:$0xff]
    %v260 = vld [vmem:[%s253 + $0x30] sm:$0xff]
    %v261 = vld [vmem:[%s253 + $0x38] sm:$0xff]
    %v262 = vld [vmem:[%s253 + $0x40] sm:$0xff]
    %v263 = vld [vmem:[%s253 + $0x48] sm:$0xff]
    %v264 = vld [vmem:[%s253 + $0x50] sm:$0xff]
    %v265 = vld [vmem:[%s253 + $0x58] sm:$0xff]
    %v266 = vld [vmem:[%s253 + $0x60] sm:$0xff]
    %v267 = vld [vmem:[%s253 + $0x68] sm:$0xff]
    %v268 = vld [vmem:[%s253 + $0x70] sm:$0xff]
    %v269 = vld [vmem:[%s253 + $0x78] sm:$0xff]
    %s270 = scalar_lea.vmem %s2, 3
    %v271 = vld [vmem:[%s270] sm:$0x1]
    %v273 = vlaneseq
    %v274 = vshrl.u32 %v273, 7
    %v275 = vsub.s32 0, %v274
    %v276 = vrot.slane %v271, %v275
    %278 = vmatprep.subr.mxu0 0.0
    %279 = vmatpush1.msra.mxu0 %v254
    %280 = vmatprep.subr.mxu0 0.0
    %281 = vmatpush1.msra.mxu0 %v255
    %282 = vmatprep.subr.mxu0 0.0
    %283 = vmatpush1.msra.mxu0 %v256
    %284 = vmatprep.subr.mxu0 0.0
    %285 = vmatpush1.msra.mxu0 %v257
    %286 = vmatprep.subr.mxu0 0.0
    %287 = vmatpush1.msra.mxu0 %v258
    %288 = vmatprep.subr.mxu0 0.0
    %289 = vmatpush1.msra.mxu0 %v259
    %290 = vmatprep.subr.mxu0 0.0
    %291 = vmatpush1.msra.mxu0 %v260
    %292 = vmatprep.subr.mxu0 0.0
    %293 = vmatpush1.msra.mxu0 %v261
    %294 = vmatprep.subr.mxu0 0.0
    %295 = vmatpush1.msra.mxu0 %v262
    %296 = vmatprep.subr.mxu0 0.0
    %297 = vmatpush1.msra.mxu0 %v263
    %298 = vmatprep.subr.mxu0 0.0
    %299 = vmatpush1.msra.mxu0 %v264
    %300 = vmatprep.subr.mxu0 0.0
    %301 = vmatpush1.msra.mxu0 %v265
    %302 = vmatprep.subr.mxu0 0.0
    %303 = vmatpush1.msra.mxu0 %v266
    %304 = vmatprep.subr.mxu0 0.0
    %305 = vmatpush1.msra.mxu0 %v267
    %306 = vmatprep.subr.mxu0 0.0
    %307 = vmatpush1.msra.mxu0 %v268
    %308 = vmatprep.subr.mxu0 0.0
    %309 = vmatpush1.msra.mxu0 %v269
    %310 = vmatprep.subr.mxu0 0.0
    %311 = vmatpush1.msra.mxu0 0.0
    %312 = vmatprep.subr.mxu0 0.0
    %313 = vmatpush1.msra.mxu0 0.0
    %314 = vmatprep.subr.mxu0 0.0
    %315 = vmatpush1.msra.mxu0 0.0
    %316 = vmatprep.subr.mxu0 0.0
    %317 = vmatpush1.msra.mxu0 0.0
    %318 = vmatprep.subr.mxu0 0.0
    %319 = vmatpush1.msra.mxu0 0.0
    %320 = vmatprep.subr.mxu0 0.0
    %321 = vmatpush1.msra.mxu0 0.0
    %322 = vmatprep.subr.mxu0 0.0
    %323 = vmatpush1.msra.mxu0 0.0
    %324 = vmatprep.subr.mxu0 0.0
    %325 = vmatpush1.msra.mxu0 0.0
    %326 = vmatprep.subr.mxu0 0.0
    %327 = vmatpush1.msra.mxu0 0.0
    %328 = vmatprep.subr.mxu0 0.0
    %329 = vmatpush1.msra.mxu0 0.0
    %330 = vmatprep.subr.mxu0 0.0
    %331 = vmatpush1.msra.mxu0 0.0
    %332 = vmatprep.subr.mxu0 0.0
    %333 = vmatpush1.msra.mxu0 0.0
    %334 = vmatprep.subr.mxu0 0.0
    %335 = vmatpush1.msra.mxu0 0.0
    %336 = vmatprep.subr.mxu0 0.0
    %337 = vmatpush1.msra.mxu0 0.0
    %338 = vmatprep.subr.mxu0 0.0
    %339 = vmatpush1.msra.mxu0 0.0
    %340 = vmatprep.subr.mxu0 0.0
    %341 = vmatpush1.msra.mxu0 0.0
    %342 = vmatprep.mubr.f32.mxu0 0.0
    %343 = vmatmul.mubr.f32.gmra.mrb[0].mxu0 %v252
    %v344 = vpop.f32.mrb[0].mxu0
    %v345 = vadd.f32 %v276, %v344
    %v346 = vpop.f32.mrb[0].mxu0
    %347 = vdwg.mxu0
    %v348 = vlaneseq
    %v349 = vand.u32 %v348, 127
    %vm350 = vcmp.lt.s32.totalorder %v349, 8
    %v351 = vsel %vm350, %v345, -1e+30
    %352 = vmax.xlane.f32.xlu0 %v351
    %v353 = vpop.xlane.xlu0 %352
    %v354 = vsub.f32 %v351, %v353
    %v355 = vmul.f32 %v354, 1.442695
    %v356 = vpow.pop %v355
    %357 = vadd.xlane.f32.xlu0 %v356
    %v358 = vpop.xlane.xlu0 %357
    %v359 = vrcp.pop %v358
    %v360 = vmul.f32 %v358, %v359
    %v361 = vsub.f32 2.0, %v360
    %v362 = vmul.f32 %v359, %v361
    %v363 = vmul.f32 %v356, %v362
    %364 = vst [vmem:[#allocation5] sm:$0xff] %v363
    // Predicated region
    $region18: #{tpu_custom_call.1} parent=1 // pred_check
      _
    $region19: #{tpu_custom_call.1} parent=1 // pred_check_branch
      %366 = sbr.rel (0) target = $region21
    $region20: #{tpu_custom_call.1} parent=1 // pred_region
      %s368 = ssub.s32 128, 128
      %369 = vsyncadd [#allocation4], %s368
      %s371 = sshll.u32 [#allocation5], 4
      %s372 = int_to_ptr.vmem [resolvable:$true] %s371
      %374 = dma.vmem_to_hbm [thread:$0]  %s372, 128, %s3, [#allocation4]
    $region21: #{tpu_custom_call.1} parent=1 // pred_fallthru
      _
    // Predicated region
    $region22: #{tpu_custom_call.1} parent=1 // pred_check
      _
    $region23: #{tpu_custom_call.1} parent=1 // pred_check_branch
      %376 = sbr.rel (0) target = $region25
    $region24: #{tpu_custom_call.1} parent=1 // pred_region
      %377 = dma.done [#allocation4], 128
    $region25: #{tpu_custom_call.1} parent=1 // pred_fallthru
      _
    %378 = vsyncpa [#allocation3], 1
    %379 = vsyncpa [#allocation4], 1

</llo_original>
